<compile_context>
chip_gen: v5e
topology: v5e:2x2
jax: 0.10.0
libtpu: 0.0.40
codegen_flags: <defaults>
</compile_context>

<pallas_src>
import jax
import jax.numpy as jnp
from jax.experimental import pallas as pl
from jax.experimental.pallas import tpu as pltpu


def _round_up(x: int, m: int) -> int:
    return ((x + m - 1) // m) * m


def _bow_mlp_kernel(x_ref, w1_ref, b1_ref, w2_ref, b2_ref, out_ref, acc_ref):
    # x:  (TB, TV)  bf16      w1: (TV, Hp) bf16     b1: (1, Hp) f32
    # w2: (Hp, Lp)  bf16      b2: (1, Lp)  f32      out: (TB, Lp) f32
    # acc: (TB, Hp) f32 scratch, carried across the V-reduction (last) axis.
    k = pl.program_id(1)

    @pl.when(k == 0)
    def _():
        acc_ref[...] = jnp.zeros_like(acc_ref)

    acc_ref[...] += jnp.dot(x_ref[...], w1_ref[...],
                            preferred_element_type=jnp.float32)

    @pl.when(k == pl.num_programs(1) - 1)
    def _():
        h = jnp.maximum(acc_ref[...] + b1_ref[...], 0.0)          # f32 epilogue
        y = jnp.dot(h.astype(jnp.bfloat16), w2_ref[...],
                    preferred_element_type=jnp.float32) + b2_ref[...]
        out_ref[...] = y.astype(out_ref.dtype)


def prepare_bow_params(w1, b1, w2, b2, *, tile_v=2048):
    """One-time (init-time) packing of PyTorch-layout nn.Linear params.

    w1: (H, V), b1: (H,), w2: (L, H), b2: (L,)  -- nn.Linear (out, in) layout.
    Pads H and L to 128 lanes, transposes to (in, out), casts weights to bf16.
    Done once, outside the per-forward hot path.
    """
    H, V = w1.shape
    L = w2.shape[0]
    Hp = _round_up(max(H, 1), 128)
    Lp = _round_up(max(L, 1), 128)
    tv = min(int(tile_v), _round_up(V, 128))
    Vp = _round_up(V, tv)

    w1_t = jnp.zeros((Vp, Hp), jnp.bfloat16).at[:V, :H].set(
        jnp.transpose(w1).astype(jnp.bfloat16))
    w2_t = jnp.zeros((Hp, Lp), jnp.bfloat16).at[:H, :L].set(
        jnp.transpose(w2).astype(jnp.bfloat16))
    b1_p = jnp.zeros((1, Hp), jnp.float32).at[0, :H].set(b1.astype(jnp.float32))
    b2_p = jnp.zeros((1, Lp), jnp.float32).at[0, :L].set(b2.astype(jnp.float32))

    return dict(w1=w1_t, b1=b1_p, w2=w2_t, b2=b2_p,
                V=V, Vp=Vp, tile_v=tv, Hp=Hp, Lp=Lp, L=L)


def bow_classifier_forward(bow_vec, params, *, tile_b=128):
    """Pallas forward pass: final(relu(linear(bow_vec))) -> (B, L) f32 logits."""
    B, V = bow_vec.shape
    assert V == params["V"], "vocab size mismatch with prepared params"
    Vp, tv = params["Vp"], params["tile_v"]
    Hp, Lp, L = params["Hp"], params["Lp"], params["L"]

    tb = min(int(tile_b), _round_up(B, 8))
    Bp = _round_up(B, tb)

    # Pad activations to the tiled, lane-aligned shape; zeros in the padded
    # rows/cols contribute nothing to the matmuls.
    x = jnp.zeros((Bp, Vp), jnp.bfloat16).at[:B, :V].set(
        bow_vec.astype(jnp.bfloat16))

    grid = (Bp // tb, Vp // tv)   # (batch tiles, V reduction tiles) -- K last

    out = pl.pallas_call(
        _bow_mlp_kernel,
        out_shape=jax.ShapeDtypeStruct((Bp, Lp), jnp.float32),
        grid=grid,
        in_specs=[
            pl.BlockSpec((tb, tv), lambda i, k: (i, k)),   # x: batch+K tiled
            pl.BlockSpec((tv, Hp), lambda i, k: (k, 0)),   # w1: K tiled
            pl.BlockSpec((1, Hp), lambda i, k: (0, 0)),    # b1: VMEM-resident
            pl.BlockSpec((Hp, Lp), lambda i, k: (0, 0)),   # w2: VMEM-resident
            pl.BlockSpec((1, Lp), lambda i, k: (0, 0)),    # b2: VMEM-resident
        ],
        out_specs=pl.BlockSpec((tb, Lp), lambda i, k: (i, 0)),
        scratch_shapes=[pltpu.VMEM((tb, Hp), jnp.float32)],
        compiler_params=pltpu.CompilerParams(
            dimension_semantics=("parallel", "arbitrary")),
    )(x, params["w1"], params["b1"], params["w2"], params["b2"])

    return out[:B, :L]


def _reference_forward(bow_vec, w1, b1, w2, b2):
    # bf16-consistent reference (same MXU input dtypes as the kernel).
    xb = bow_vec.astype(jnp.bfloat16).astype(jnp.float32)
    w1b = w1.astype(jnp.bfloat16).astype(jnp.float32)
    w2b = w2.astype(jnp.bfloat16).astype(jnp.float32)
    h = jnp.maximum(xb @ w1b.T + b1, 0.0)
    hb = h.astype(jnp.bfloat16).astype(jnp.float32)
    return hb @ w2b.T + b2


if __name__ == "__main__":
    # Small shapes consistent with the module (num_hidden uses the default=2).
    batch = 8
    vocab_size = 256
    num_hidden = 2
    num_labels = 4

    key = jax.random.PRNGKey(0)
    k_x, k_w1, k_b1, k_w2, k_b2 = jax.random.split(key, 5)

    # PyTorch-style init: U(-1/sqrt(fan_in), +1/sqrt(fan_in)).
    bound1 = 1.0 / float(vocab_size) ** 0.5
    bound2 = 1.0 / float(num_hidden) ** 0.5
    w1 = jax.random.uniform(k_w1, (num_hidden, vocab_size), jnp.float32,
                            -bound1, bound1)
    b1 = jax.random.uniform(k_b1, (num_hidden,), jnp.float32, -bound1, bound1)
    w2 = jax.random.uniform(k_w2, (num_labels, num_hidden), jnp.float32,
                            -bound2, bound2)
    b2 = jax.random.uniform(k_b2, (num_labels,), jnp.float32, -bound2, bound2)

    # Synthetic bag-of-words counts (small non-negative ints -> exact in bf16).
    bow_vec = jax.random.randint(k_x, (batch, vocab_size), 0, 3).astype(jnp.float32)

    # One-time param packing (outside the per-call hot path).
    params = prepare_bow_params(w1, b1, w2, b2)

    out = bow_classifier_forward(bow_vec, params)
    out = jax.block_until_ready(out)

    ref = _reference_forward(bow_vec, w1, b1, w2, b2)
    assert out.shape == (batch, num_labels)
    assert jnp.allclose(out, ref, atol=5e-3, rtol=5e-3)

    print("KERNEL_OK")
</pallas_src>

<mosaic_0001>
module attributes {stable_mosaic.version = 11 : i64} {
  func.func @_bow_mlp_kernel(%arg0: i32, %arg1: i32, %arg2: memref<8x256xbf16, #tpu.memory_space<vmem>>, %arg3: memref<256x128xbf16, #tpu.memory_space<vmem>>, %arg4: memref<1x128xf32, #tpu.memory_space<vmem>>, %arg5: memref<128x128xbf16, #tpu.memory_space<vmem>>, %arg6: memref<1x128xf32, #tpu.memory_space<vmem>>, %arg7: memref<8x128xf32, #tpu.memory_space<vmem>>, %arg8: memref<8x128xf32, #tpu.memory_space<vmem>>) attributes {dimension_semantics = [#tpu.dimension_semantics<parallel>, #tpu.dimension_semantics<arbitrary>], iteration_bounds = array<i64: 1, 1>, scalar_prefetch = 0 : i64, scratch_operands = 1 : i64, tpu.core_type = #tpu.core_type<tc>, window_params = [{transform_indices = @transform_0, window_bounds = array<i64: 8, 256>}, {transform_indices = @transform_1, window_bounds = array<i64: 256, 128>}, {pipeline_mode = #tpu.pipeline_mode<synchronous>, transform_indices = @transform_2, window_bounds = array<i64: 1, 128>}, {pipeline_mode = #tpu.pipeline_mode<synchronous>, transform_indices = @transform_3, window_bounds = array<i64: 128, 128>}, {pipeline_mode = #tpu.pipeline_mode<synchronous>, transform_indices = @transform_4, window_bounds = array<i64: 1, 128>}, {transform_indices = @transform_5, window_bounds = array<i64: 8, 128>}]} {
    %c0_i32 = arith.constant 0 : i32
    %0 = arith.cmpi eq, %arg1, %c0_i32 : i32
    %1 = arith.extui %0 : i1 to i32
    %c0_i32_0 = arith.constant 0 : i32
    %2 = arith.cmpi ne, %1, %c0_i32_0 : i32
    scf.if %2 {
      %cst_10 = arith.constant 0.000000e+00 : f32
      %12 = vector.broadcast %cst_10 : f32 to vector<8x128xf32>
      %c0_11 = arith.constant 0 : index
      %c0_12 = arith.constant 0 : index
      %13 = vector.load %arg8[%c0_11, %c0_12] : memref<8x128xf32, #tpu.memory_space<vmem>>, vector<8x128xf32>
      tpu.vector_store %arg8[%c0_11, %c0_12], %12 {strides = array<i32>} : memref<8x128xf32, #tpu.memory_space<vmem>>, vector<8x128xf32>,
    } else {
    }
    %c0 = arith.constant 0 : index
    %c0_1 = arith.constant 0 : index
    %3 = vector.load %arg8[%c0, %c0_1] : memref<8x128xf32, #tpu.memory_space<vmem>>, vector<8x128xf32>
    %c0_2 = arith.constant 0 : index
    %c0_3 = arith.constant 0 : index
    %4 = vector.load %arg2[%c0_2, %c0_3] : memref<8x256xbf16, #tpu.memory_space<vmem>>, vector<8x256xbf16>
    %c0_4 = arith.constant 0 : index
    %c0_5 = arith.constant 0 : index
    %5 = vector.load %arg3[%c0_4, %c0_5] : memref<256x128xbf16, #tpu.memory_space<vmem>>, vector<256x128xbf16>
    %cst = arith.constant dense<0.000000e+00> : vector<8x128xf32>
    %6 = tpu.matmul %4, %5, %cst {dimension_numbers = #tpu.dot_dimension_numbers<[1], [0], [0], [1], [0, 0, 1, 1], [], []>} : vector<8x256xbf16>, vector<256x128xbf16>, vector<8x128xf32> -> vector<8x128xf32>
    %7 = arith.addf %3, %6 : vector<8x128xf32>
    %c0_6 = arith.constant 0 : index
    %c0_7 = arith.constant 0 : index
    %8 = vector.load %arg8[%c0_6, %c0_7] : memref<8x128xf32, #tpu.memory_space<vmem>>, vector<8x128xf32>
    tpu.vector_store %arg8[%c0_6, %c0_7], %7 {strides = array<i32>} : memref<8x128xf32, #tpu.memory_space<vmem>>, vector<8x128xf32>,
    %c0_i32_8 = arith.constant 0 : i32
    %9 = arith.cmpi eq, %arg1, %c0_i32_8 : i32
    %10 = arith.extui %9 : i1 to i32
    %c0_i32_9 = arith.constant 0 : i32
    %11 = arith.cmpi ne, %10, %c0_i32_9 : i32
    scf.if %11 {
      %c0_10 = arith.constant 0 : index
      %c0_11 = arith.constant 0 : index
      %12 = vector.load %arg8[%c0_10, %c0_11] : memref<8x128xf32, #tpu.memory_space<vmem>>, vector<8x128xf32>
      %c0_12 = arith.constant 0 : index
      %c0_13 = arith.constant 0 : index
      %13 = vector.load %arg4[%c0_12, %c0_13] : memref<1x128xf32, #tpu.memory_space<vmem>>, vector<1x128xf32>
      %14 = vector.broadcast %13 : vector<1x128xf32> to vector<8x128xf32>
      %15 = arith.addf %12, %14 : vector<8x128xf32>
      %cst_14 = arith.constant 0.000000e+00 : f32
      %16 = vector.broadcast %cst_14 : f32 to vector<8x128xf32>
      %17 = arith.maximumf %15, %16 : vector<8x128xf32>
      %18 = arith.truncf %17 : vector<8x128xf32> to vector<8x128xbf16>
      %c0_15 = arith.constant 0 : index
      %c0_16 = arith.constant 0 : index
      %19 = vector.load %arg5[%c0_15, %c0_16] : memref<128x128xbf16, #tpu.memory_space<vmem>>, vector<128x128xbf16>
      %cst_17 = arith.constant dense<0.000000e+00> : vector<8x128xf32>
      %20 = tpu.matmul %18, %19, %cst_17 {dimension_numbers = #tpu.dot_dimension_numbers<[1], [0], [0], [1], [0, 0, 1, 1], [], []>} : vector<8x128xbf16>, vector<128x128xbf16>, vector<8x128xf32> -> vector<8x128xf32>
      %c0_18 = arith.constant 0 : index
      %c0_19 = arith.constant 0 : index
      %21 = vector.load %arg6[%c0_18, %c0_19] : memref<1x128xf32, #tpu.memory_space<vmem>>, vector<1x128xf32>
      %22 = vector.broadcast %21 : vector<1x128xf32> to vector<8x128xf32>
      %23 = arith.addf %20, %22 : vector<8x128xf32>
      %c0_20 = arith.constant 0 : index
      %c0_21 = arith.constant 0 : index
      %24 = vector.load %arg7[%c0_20, %c0_21] : memref<8x128xf32, #tpu.memory_space<vmem>>, vector<8x128xf32>
      tpu.vector_store %arg7[%c0_20, %c0_21], %23 {strides = array<i32>} : memref<8x128xf32, #tpu.memory_space<vmem>>, vector<8x128xf32>,
    } else {
    }
    return
  }
  func.func @transform_0(%arg0: i32, %arg1: i32) -> (i32, i32) {
    %c0_i32 = arith.constant 0 : i32
    return %arg0, %arg1 : i32, i32
  }
  func.func @transform_1(%arg0: i32, %arg1: i32) -> (i32, i32) {
    %c0_i32 = arith.constant 0 : i32
    %c0_i32_0 = arith.constant 0 : i32
    return %arg1, %c0_i32 : i32, i32
  }
  func.func @transform_2(%arg0: i32, %arg1: i32) -> (i32, i32) {
    %c0_i32 = arith.constant 0 : i32
    %c0_i32_0 = arith.constant 0 : i32
    %c0_i32_1 = arith.constant 0 : i32
    return %c0_i32, %c0_i32_0 : i32, i32
  }
  func.func @transform_3(%arg0: i32, %arg1: i32) -> (i32, i32) {
    %c0_i32 = arith.constant 0 : i32
    %c0_i32_0 = arith.constant 0 : i32
    %c0_i32_1 = arith.constant 0 : i32
    return %c0_i32, %c0_i32_0 : i32, i32
  }
  func.func @transform_4(%arg0: i32, %arg1: i32) -> (i32, i32) {
    %c0_i32 = arith.constant 0 : i32
    %c0_i32_0 = arith.constant 0 : i32
    %c0_i32_1 = arith.constant 0 : i32
    return %c0_i32, %c0_i32_0 : i32, i32
  }
  func.func @transform_5(%arg0: i32, %arg1: i32) -> (i32, i32) {
    %c0_i32 = arith.constant 0 : i32
    %c0_i32_0 = arith.constant 0 : i32
    return %arg0, %c0_i32 : i32, i32
  }
}

</mosaic_0001>

<llo_original>
// kernel: tpu_custom_call.1
$region0: #{tpu_custom_call.1}
  #allocation0 [shape = 'u32[]', space=smem, size = 0x4, offset = 0x4, fixed_abs, tag = 'smem constant byte address 0x4 - core index']
  #allocation1 [shape = 'u32[72,128]{1,0:T(1,128)}', space=vmem, size = 0x9000, scoped, tag = 'internal scratch']
  #allocation2 [shape = 'f32[8,128]{1,0:T(8,128)}', space=vmem, size = 0x1000, scoped, tag = 'scratch operand']
  %s0 = inlined_call_operand.hbm [shape: bf16[8,256], index: 0, kind: input, shape index: {}]
  %s1 = inlined_call_operand.hbm [shape: bf16[256,128], index: 1, kind: input, shape index: {}]
  %s2 = inlined_call_operand.vmem [shape: f32[1,128], index: 2, kind: input, shape index: {}]
  %s3 = inlined_call_operand.hbm [shape: bf16[128,128], index: 3, kind: input, shape index: {}]
  %s4 = inlined_call_operand.vmem [shape: f32[1,128], index: 4, kind: input, shape index: {}]
  %s5 = inlined_call_operand.hbm [shape: f32[8,128], index: 5, kind: output, shape index: {}]
  %s6 = sld [smem:[#allocation0]]
  $region50: #{tpu_custom_call.1} parent=0
    _
  %s8 = ssub.s32 1, %s6
  %s9 = scalar_select 0, %s8, %s6
  $region1: #{tpu_custom_call.1} parent=0
    #allocation3 [shape = 'u8[4096]{0}', space=vmem, size = 0x1000, scoped, tag = 'input window, operand 0, single buffered']
    #allocation4 [shape = 's32[1]{0}', space=sflag, size = 0x4, scoped, tag = 'scoped memory for tpu_custom_call.1']
    #allocation5 [shape = 's32[1]{0}', space=sflag, size = 0x4, scoped, tag = 'scoped memory for tpu_custom_call.1']
    #allocation6 [shape = 'u8[65536]{0}', space=vmem, size = 0x10000, scoped, tag = 'input window, operand 1, single buffered']
    #allocation7 [shape = 's32[1]{0}', space=sflag, size = 0x4, scoped, tag = 'scoped memory for tpu_custom_call.1']
    #allocation8 [shape = 'u8[32768]{0}', space=vmem, size = 0x8000, scoped, tag = 'input window, operand 3, single buffered']
    #allocation9 [shape = 'u8[4096]{0}', space=vmem, size = 0x1000, scoped, tag = 'output window, operand 0, single buffered']
    %10 = vsyncpa [#allocation4], 0
    %11 = vsyncpa [#allocation7], 0
    %12 = vsyncpa [#allocation5], 0
    // Predicated region
    $region2: #{tpu_custom_call.1} parent=1 // pred_check
      _
    $region3: #{tpu_custom_call.1} parent=1 // pred_check_branch
      %14 = sbr.rel (0) target = $region5
    $region4: #{tpu_custom_call.1} parent=1 // pred_region
      %16 = vsyncadd [#allocation4], 0
      %s18 = sshll.u32 %s0, 4
      %s19 = int_to_ptr.hbm [resolvable:$true] %s18
      %s20 = sshll.u32 [#allocation3], 4
      %s21 = int_to_ptr.vmem [resolvable:$true] %s20
      %23 = dma.hbm_to_vmem [thread:$0]  %s19, 128, %s21, [#allocation4]
    $region5: #{tpu_custom_call.1} parent=1 // pred_fallthru
      _
    // Predicated region
    $region6: #{tpu_custom_call.1} parent=1 // pred_check
      _
    $region7: #{tpu_custom_call.1} parent=1 // pred_check_branch
      %25 = sbr.rel (0) target = $region9
    $region8: #{tpu_custom_call.1} parent=1 // pred_region
      %27 = vsyncadd [#allocation7], 0
      %s28 = sshll.u32 %s1, 4
      %s29 = int_to_ptr.hbm [resolvable:$true] %s28
      %s30 = sshll.u32 [#allocation6], 4
      %s31 = int_to_ptr.vmem [resolvable:$true] %s30
      %36 = dma.hbm_to_vmem [thread:$0]  %s29, 2048, %s31, [#allocation7], 64, 64, 4
    $region9: #{tpu_custom_call.1} parent=1 // pred_fallthru
      _
    // Predicated region
    $region10: #{tpu_custom_call.1} parent=1 // pred_check
      _
    $region11: #{tpu_custom_call.1} parent=1 // pred_check_branch
      %38 = sbr.rel (0) target = $region13
    $region12: #{tpu_custom_call.1} parent=1 // pred_region
      _
    $region13: #{tpu_custom_call.1} parent=1 // pred_fallthru
      _
    // Predicated region
    $region14: #{tpu_custom_call.1} parent=1 // pred_check
      _
    $region15: #{tpu_custom_call.1} parent=1 // pred_check_branch
      %40 = sbr.rel (0) target = $region17
    $region16: #{tpu_custom_call.1} parent=1 // pred_region
      %42 = vsyncadd [#allocation7], 0
      %s43 = sshll.u32 %s3, 4
      %s44 = int_to_ptr.hbm [resolvable:$true] %s43
      %s45 = sshll.u32 [#allocation8], 4
      %s46 = int_to_ptr.vmem [resolvable:$true] %s45
      %51 = dma.hbm_to_vmem [thread:$0]  %s44, 1024, %s46, [#allocation7], 64, 64, 4
    $region17: #{tpu_custom_call.1} parent=1 // pred_fallthru
      _
    // Predicated region
    $region18: #{tpu_custom_call.1} parent=1 // pred_check
      _
    $region19: #{tpu_custom_call.1} parent=1 // pred_check_branch
      %53 = sbr.rel (0) target = $region21
    $region20: #{tpu_custom_call.1} parent=1 // pred_region
      _
    $region21: #{tpu_custom_call.1} parent=1 // pred_fallthru
      _
    // Predicated region
    $region22: #{tpu_custom_call.1} parent=1 // pred_check
      _
    $region23: #{tpu_custom_call.1} parent=1 // pred_check_branch
      %55 = sbr.rel (0) target = $region25
    $region24: #{tpu_custom_call.1} parent=1 // pred_region
      %57 = dma.done [#allocation4], 128
    $region25: #{tpu_custom_call.1} parent=1 // pred_fallthru
      _
    // Predicated region
    $region26: #{tpu_custom_call.1} parent=1 // pred_check
      _
    $region27: #{tpu_custom_call.1} parent=1 // pred_check_branch
      %59 = sbr.rel (0) target = $region29
    $region28: #{tpu_custom_call.1} parent=1 // pred_region
      %61 = dma.done [#allocation7], 2048
    $region29: #{tpu_custom_call.1} parent=1 // pred_fallthru
      _
    // Predicated region
    $region30: #{tpu_custom_call.1} parent=1 // pred_check
      _
    $region31: #{tpu_custom_call.1} parent=1 // pred_check_branch
      %63 = sbr.rel (0) target = $region33
    $region32: #{tpu_custom_call.1} parent=1 // pred_region
      %65 = dma.done [#allocation7], 1024
    $region33: #{tpu_custom_call.1} parent=1 // pred_fallthru
      _
    %p66 = scmp.eq.s32.totalorder 0, 0
    // Predicated region
    $region34: #{tpu_custom_call.1} parent=1 // pred_check
      %p67 = pneg %p66
    $region35: #{tpu_custom_call.1} parent=1 // pred_check_branch
      %69 = sbr.rel (%p67) target = $region37
    $region36: #{tpu_custom_call.1} parent=1 // pred_region
      %70 = vst [vmem:[#allocation2] sm:$0xff] 0.0
    $region37: #{tpu_custom_call.1} parent=1 // pred_fallthru
      _
    %v71 = vld [vmem:[#allocation2] sm:$0xff]
    %v72 = vld [vmem:[#allocation3] sm:$0xff]
    %v73 = vld [vmem:[#allocation6] sm:$0xf]
    %v74 = vld [vmem:[#allocation6 + $0x4] sm:$0xf]
    %v75 = vld [vmem:[#allocation6 + $0x8] sm:$0xf]
    %v76 = vld [vmem:[#allocation6 + $0xc] sm:$0xf]
    %v77 = vld [vmem:[#allocation6 + $0x10] sm:$0xf]
    %v78 = vld [vmem:[#allocation6 + $0x14] sm:$0xf]
    %v79 = vld [vmem:[#allocation6 + $0x18] sm:$0xf]
    %v80 = vld [vmem:[#allocation6 + $0x1c] sm:$0xf]
    %v81 = vld [vmem:[#allocation6 + $0x20] sm:$0xf]
    %v82 = vld [vmem:[#allocation6 + $0x24] sm:$0xf]
    %v83 = vld [vmem:[#allocation6 + $0x28] sm:$0xf]
    %v84 = vld [vmem:[#allocation6 + $0x2c] sm:$0xf]
    %v85 = vld [vmem:[#allocation6 + $0x30] sm:$0xf]
    %v86 = vld [vmem:[#allocation6 + $0x34] sm:$0xf]
    %v87 = vld [vmem:[#allocation6 + $0x38] sm:$0xf]
    %v88 = vld [vmem:[#allocation6 + $0x3c] sm:$0xf]
    %v89 = vld [vmem:[#allocation6 + $0x40] sm:$0xf]
    %v90 = vld [vmem:[#allocation6 + $0x44] sm:$0xf]
    %v91 = vld [vmem:[#allocation6 + $0x48] sm:$0xf]
    %v92 = vld [vmem:[#allocation6 + $0x4c] sm:$0xf]
    %v93 = vld [vmem:[#allocation6 + $0x50] sm:$0xf]
    %v94 = vld [vmem:[#allocation6 + $0x54] sm:$0xf]
    %v95 = vld [vmem:[#allocation6 + $0x58] sm:$0xf]
    %v96 = vld [vmem:[#allocation6 + $0x5c] sm:$0xf]
    %v97 = vld [vmem:[#allocation6 + $0x60] sm:$0xf]
    %v98 = vld [vmem:[#allocation6 + $0x64] sm:$0xf]
    %v99 = vld [vmem:[#allocation6 + $0x68] sm:$0xf]
    %v100 = vld [vmem:[#allocation6 + $0x6c] sm:$0xf]
    %v101 = vld [vmem:[#allocation6 + $0x70] sm:$0xf]
    %v102 = vld [vmem:[#allocation6 + $0x74] sm:$0xf]
    %v103 = vld [vmem:[#allocation6 + $0x78] sm:$0xf]
    %v104 = vld [vmem:[#allocation6 + $0x7c] sm:$0xf]
    %v106 = vunpack.c.l.b16 %v72
    %v107 = vunpack.c.h.b16 %v72
    %v108 = vpack.c.b16 %v106, %v106
    %v109 = vpack.c.b16 %v107, %v107
    %v144 = vunpack.c.l.b16 %v73
    %v145 = vunpack.c.l.b16 %v74
    %v146 = vunpack.c.l.b16 %v75
    %v147 = vunpack.c.l.b16 %v76
    %v148 = vunpack.c.l.b16 %v77
    %v149 = vunpack.c.l.b16 %v78
    %v150 = vunpack.c.l.b16 %v79
    %v151 = vunpack.c.l.b16 %v80
    %v152 = vunpack.c.l.b16 %v81
    %v153 = vunpack.c.l.b16 %v82
    %v154 = vunpack.c.l.b16 %v83
    %v155 = vunpack.c.l.b16 %v84
    %v156 = vunpack.c.l.b16 %v85
    %v157 = vunpack.c.l.b16 %v86
    %v158 = vunpack.c.l.b16 %v87
    %v159 = vunpack.c.l.b16 %v88
    %v160 = vunpack.c.l.b16 %v89
    %v161 = vunpack.c.l.b16 %v90
    %v162 = vunpack.c.l.b16 %v91
    %v163 = vunpack.c.l.b16 %v92
    %v164 = vunpack.c.l.b16 %v93
    %v165 = vunpack.c.l.b16 %v94
    %v166 = vunpack.c.l.b16 %v95
    %v167 = vunpack.c.l.b16 %v96
    %v168 = vunpack.c.l.b16 %v97
    %v169 = vunpack.c.l.b16 %v98
    %v170 = vunpack.c.l.b16 %v99
    %v171 = vunpack.c.l.b16 %v100
    %v172 = vunpack.c.l.b16 %v101
    %v173 = vunpack.c.l.b16 %v102
    %v174 = vunpack.c.l.b16 %v103
    %v175 = vunpack.c.l.b16 %v104
    %v176 = vpack.c.b16 %v145, %v144
    %v177 = vpack.c.b16 %v147, %v146
    %v178 = vpack.c.b16 %v149, %v148
    %v179 = vpack.c.b16 %v151, %v150
    %v180 = vpack.c.b16 %v153, %v152
    %v181 = vpack.c.b16 %v155, %v154
    %v182 = vpack.c.b16 %v157, %v156
    %v183 = vpack.c.b16 %v159, %v158
    %v184 = vpack.c.b16 %v161, %v160
    %v185 = vpack.c.b16 %v163, %v162
    %v186 = vpack.c.b16 %v165, %v164
    %v187 = vpack.c.b16 %v167, %v166
    %v188 = vpack.c.b16 %v169, %v168
    %v189 = vpack.c.b16 %v171, %v170
    %v190 = vpack.c.b16 %v173, %v172
    %v191 = vpack.c.b16 %v175, %v174
    %208 = vmatpush.bf16.msra.mxu0 %v183
    %209 = vmatpush.bf16.msra.mxu0 %v182
    %210 = vmatpush.bf16.msra.mxu0 %v181
    %211 = vmatpush.bf16.msra.mxu0 %v180
    %212 = vmatpush.bf16.msra.mxu0 %v179
    %213 = vmatpush.bf16.msra.mxu0 %v178
    %214 = vmatpush.bf16.msra.mxu0 %v177
    %215 = vmatpush.bf16.msra.mxu0 %v176
    %216 = vmatmul.bf16.gmra.mxu0 %v108
    %v217 = vpop.f32.mrf.mxu0
    %v218 = vadd.f32 0.0, %v217
    %v219 = vpop.f32.mrf.mxu0
    %220 = vdwg.mxu0
    %221 = vmatpush.bf16.msra.mxu0 %v191
    %222 = vmatpush.bf16.msra.mxu0 %v190
    %223 = vmatpush.bf16.msra.mxu0 %v189
    %224 = vmatpush.bf16.msra.mxu0 %v188
    %225 = vmatpush.bf16.msra.mxu0 %v187
    %226 = vmatpush.bf16.msra.mxu0 %v186
    %227 = vmatpush.bf16.msra.mxu0 %v185
    %228 = vmatpush.bf16.msra.mxu0 %v184
    %229 = vmatmul.bf16.gmra.mxu0 %v109
    %v230 = vpop.f32.mrf.mxu0
    %v231 = vadd.f32 %v218, %v230
    %v232 = vpop.f32.mrf.mxu0
    %233 = vdwg.mxu0
    %v234 = vadd.f32 %v71, %v231
    %235 = vst [vmem:[#allocation2] sm:$0xff] %v234
    // Predicated region
    $region38: #{tpu_custom_call.1} parent=1 // pred_check
      %p236 = pneg %p66
    $region39: #{tpu_custom_call.1} parent=1 // pred_check_branch
      %238 = sbr.rel (%p236) target = $region41
    $region40: #{tpu_custom_call.1} parent=1 // pred_region
      %v239 = vld [vmem:[#allocation2] sm:$0xff]
      %v240 = vld [vmem:[%s2] sm:$0x1]
      %v242 = vperm.slane %v240, 0
      %v244 = vadd.f32 %v239, %v242
      %v245 = vmax.f32 %v244, 0.0
      %v246 = vpack.c.bf16 %v245, %v245
      %v247 = vld [vmem:[#allocation8] sm:$0xf]
      %v248 = vld [vmem:[#allocation8 + $0x4] sm:$0xf]
      %v249 = vld [vmem:[#allocation8 + $0x8] sm:$0xf]
      %v250 = vld [vmem:[#allocation8 + $0xc] sm:$0xf]
      %v251 = vld [vmem:[#allocation8 + $0x10] sm:$0xf]
      %v252 = vld [vmem:[#allocation8 + $0x14] sm:$0xf]
      %v253 = vld [vmem:[#allocation8 + $0x18] sm:$0xf]
      %v254 = vld [vmem:[#allocation8 + $0x1c] sm:$0xf]
      %v255 = vld [vmem:[#allocation8 + $0x20] sm:$0xf]
      %v256 = vld [vmem:[#allocation8 + $0x24] sm:$0xf]
      %v257 = vld [vmem:[#allocation8 + $0x28] sm:$0xf]
      %v258 = vld [vmem:[#allocation8 + $0x2c] sm:$0xf]
      %v259 = vld [vmem:[#allocation8 + $0x30] sm:$0xf]
      %v260 = vld [vmem:[#allocation8 + $0x34] sm:$0xf]
      %v261 = vld [vmem:[#allocation8 + $0x38] sm:$0xf]
      %v262 = vld [vmem:[#allocation8 + $0x3c] sm:$0xf]
      %v263 = vld [vmem:[%s4] sm:$0x1]
      %v265 = vperm.slane %v263, 0
      %v283 = vunpack.c.l.b16 %v247
      %v284 = vunpack.c.l.b16 %v248
      %v285 = vunpack.c.l.b16 %v249
      %v286 = vunpack.c.l.b16 %v250
      %v287 = vunpack.c.l.b16 %v251
      %v288 = vunpack.c.l.b16 %v252
      %v289 = vunpack.c.l.b16 %v253
      %v290 = vunpack.c.l.b16 %v254
      %v291 = vunpack.c.l.b16 %v255
      %v292 = vunpack.c.l.b16 %v256
      %v293 = vunpack.c.l.b16 %v257
      %v294 = vunpack.c.l.b16 %v258
      %v295 = vunpack.c.l.b16 %v259
      %v296 = vunpack.c.l.b16 %v260
      %v297 = vunpack.c.l.b16 %v261
      %v298 = vunpack.c.l.b16 %v262
      %v299 = vpack.c.b16 %v284, %v283
      %v300 = vpack.c.b16 %v286, %v285
      %v301 = vpack.c.b16 %v288, %v287
      %v302 = vpack.c.b16 %v290, %v289
      %v303 = vpack.c.b16 %v292, %v291
      %v304 = vpack.c.b16 %v294, %v293
      %v305 = vpack.c.b16 %v296, %v295
      %v306 = vpack.c.b16 %v298, %v297
      %315 = vmatpush.bf16.msra.mxu0 %v306
      %316 = vmatpush.bf16.msra.mxu0 %v305
      %317 = vmatpush.bf16.msra.mxu0 %v304
      %318 = vmatpush.bf16.msra.mxu0 %v303
      %319 = vmatpush.bf16.msra.mxu0 %v302
      %320 = vmatpush.bf16.msra.mxu0 %v301
      %321 = vmatpush.bf16.msra.mxu0 %v300
      %322 = vmatpush.bf16.msra.mxu0 %v299
      %323 = vmatmul.bf16.gmra.mxu0 %v246
      %v324 = vpop.f32.mrf.mxu0
      %v325 = vadd.f32 %v265, %v324
      %v326 = vpop.f32.mrf.mxu0
      %327 = vdwg.mxu0
      %328 = vst [vmem:[#allocation9] sm:$0xff] %v325
    $region41: #{tpu_custom_call.1} parent=1 // pred_fallthru
      _
    // Predicated region
    $region42: #{tpu_custom_call.1} parent=1 // pred_check
      _
    $region43: #{tpu_custom_call.1} parent=1 // pred_check_branch
      %330 = sbr.rel (0) target = $region45
    $region44: #{tpu_custom_call.1} parent=1 // pred_region
      %332 = vsyncadd [#allocation5], 0
      %s334 = sshll.u32 [#allocation9], 4
      %s335 = int_to_ptr.vmem [resolvable:$true] %s334
      %s336 = sshll.u32 %s5, 4
      %s337 = int_to_ptr.hbm [resolvable:$true] %s336
      %339 = dma.vmem_to_hbm [thread:$0]  %s335, 128, %s337, [#allocation5]
    $region45: #{tpu_custom_call.1} parent=1 // pred_fallthru
      _
    // Predicated region
    $region46: #{tpu_custom_call.1} parent=1 // pred_check
      _
    $region47: #{tpu_custom_call.1} parent=1 // pred_check_branch
      %341 = sbr.rel (0) target = $region49
    $region48: #{tpu_custom_call.1} parent=1 // pred_region
      %343 = dma.done [#allocation5], 128
    $region49: #{tpu_custom_call.1} parent=1 // pred_fallthru
      _
    %344 = vsyncpa [#allocation4], 1
    %345 = vsyncpa [#allocation7], 1
    %346 = vsyncpa [#allocation5], 1

</llo_original>
